<compile_context>
chip_gen: v5e
topology: v5e:2x2
jax: 0.10.0
libtpu: 0.0.40
codegen_flags: <defaults>
</compile_context>

<pallas_src>
import functools

import jax
import jax.numpy as jnp
from jax.experimental import pallas as pl
from jax.experimental.pallas import tpu as pltpu


def _round_up(x, m):
    return ((x + m - 1) // m) * m


def _cdiv(a, b):
    return -(-a // b)


def _sublane_align(*dtypes):
    """Required sublane granularity for the narrowest participating dtype."""
    itemsize = min(jnp.dtype(d).itemsize for d in dtypes)
    return max(8, 8 * (4 // max(1, itemsize)))  # 8 (f32), 16 (bf16), 32 (int8)


def _vmem_capacity_bytes():
    try:
        return int(pltpu.get_tpu_info().vmem_capacity_bytes)
    except Exception:
        return 64 << 20  # conservative fallback: v7x per-TensorCore VMEM


def _num_tensorcores():
    """2 for megacore chips (v4 / v7x), else 1."""
    try:
        kind = jax.devices()[0].device_kind.lower()
    except Exception:
        return 1
    return 2 if any(tag in kind for tag in ("v4", "7x", "v7")) else 1


def _smoothness_kernel(*refs, wsq, edge_aware, has_halo, H, n_h_inner, acc_rows):
    # ---- unpack refs according to the statically known input layout ----
    idx = 0
    flow_ref = refs[idx]; idx += 1
    img_ref = None
    if edge_aware:
        img_ref = refs[idx]; idx += 1
    flow_nx_ref = img_nx_ref = None
    if has_halo:
        flow_nx_ref = refs[idx]; idx += 1
        if edge_aware:
            img_nx_ref = refs[idx]; idx += 1
    gh_ref, gw_ref, acc_gh, acc_gw = refs[idx:idx + 4]

    tile_h = flow_ref.shape[2]
    lane_w = flow_ref.shape[3]

    o = pl.program_id(1)            # outer H split ("parallel")
    j = pl.program_id(2)            # inner H tiles ("arbitrary", accumulated)
    h_tile = o * n_h_inner + j      # global H-tile index

    @pl.when(j == 0)
    def _init():
        acc_gh[...] = jnp.zeros_like(acc_gh)
        acc_gw[...] = jnp.zeros_like(acc_gw)

    row = jax.lax.broadcasted_iota(jnp.int32, (tile_h, lane_w), 0)
    col = jax.lax.broadcasted_iota(jnp.int32, (tile_h, lane_w), 1)
    g_row = row + h_tile * tile_h               # global row index (handles tail tiles)
    # diff at (r, c) pairs element (r, c) with (r+1, c) / (r, c+1); positions whose
    # partner is past the frame (or padded tail rows) are masked out.
    h_valid = (g_row + 1) < H
    w_valid = jnp.logical_and(g_row < H, col < (lane_w - 1))
    last_row = row == (tile_h - 1)

    def next_row(x2d, nx_ref, c):
        # "next row" view of a (tile_h, W) slab (== jnp.roll(x, -1, axis=0)),
        # with the 1-row halo spliced into the last (wrapped) row.
        nxt = pltpu.roll(x2d, shift=tile_h - 1, axis=0)
        if nx_ref is not None:
            halo = nx_ref[0, c, 0:1, :].astype(jnp.float32)    # (1, W)
            nxt = jnp.where(last_row, halo, nxt)
        return nxt

    def next_col(x2d):
        # "next column" view (== jnp.roll(x, -1, axis=1)); wrap column is masked.
        return pltpu.roll(x2d, shift=lane_w - 1, axis=1)

    def fold(x2d):
        # Row-fold a (tile_h, W) term into the small (acc_rows, W) accumulator.
        if acc_rows == tile_h:
            return x2d
        return x2d.reshape(tile_h // acc_rows, acc_rows, lane_w).sum(axis=0)

    n_cf = flow_ref.shape[1]
    n_ci = img_ref.shape[1] if edge_aware else 0
    scale = (-wsq / n_ci) if edge_aware else 0.0   # exp(-wsq * mean) == exp(sum * scale)

    # -------- pass 1: H-direction terms (keeps only the *_gh slabs live) --------
    flow_gh = None
    for c in range(n_cf):
        fc = flow_ref[0, c].astype(jnp.float32)                 # (tile_h, W)
        dh = jnp.abs(next_row(fc, flow_nx_ref, c) - fc)
        flow_gh = dh if flow_gh is None else flow_gh + dh
    if edge_aware:
        img_gh = None
        for c in range(n_ci):
            ic = img_ref[0, c].astype(jnp.float32)
            dh = next_row(ic, img_nx_ref, c) - ic
            img_gh = dh * dh if img_gh is None else img_gh + dh * dh
        term_h = jnp.exp(img_gh * scale) * flow_gh
    else:
        term_h = flow_gh
    acc_gh[...] += fold(jnp.where(h_valid, term_h, 0.0))

    # -------- pass 2: W-direction terms --------
    flow_gw = None
    for c in range(n_cf):
        fc = flow_ref[0, c].astype(jnp.float32)
        dw = jnp.abs(next_col(fc) - fc)
        flow_gw = dw if flow_gw is None else flow_gw + dw
    if edge_aware:
        img_gw = None
        for c in range(n_ci):
            ic = img_ref[0, c].astype(jnp.float32)
            dw = next_col(ic) - ic
            img_gw = dw * dw if img_gw is None else img_gw + dw * dw
        term_w = jnp.exp(img_gw * scale) * flow_gw
    else:
        term_w = flow_gw
    acc_gw[...] += fold(jnp.where(w_valid, term_w, 0.0))

    @pl.when(j == n_h_inner - 1)
    def _finalize():
        gh_ref[...] = jnp.sum(acc_gh[...]).reshape(1, 1, 1)
        gw_ref[...] = jnp.sum(acc_gw[...]).reshape(1, 1, 1)


def set_smoothness_loss_pallas(flow, img, weight=150.0, edge_aware=True,
                               tile_h=None):
    """Matches set_smoothness_loss(weight, edge_aware)(flow, img) from XVFI."""
    N, Cf, H, W = flow.shape
    Ni, Ci, Hi, Wi = img.shape
    assert (N, H, W) == (Ni, Hi, Wi), "flow / img batch+spatial shapes must match"

    dtypes = (flow.dtype,) + ((img.dtype,) if edge_aware else ())
    align = _sublane_align(*dtypes)

    cap = _vmem_capacity_bytes()
    cores = _num_tensorcores()

    # ---- generation-aware VMEM budget ----
    in_row_bytes = Cf * jnp.dtype(flow.dtype).itemsize * W
    if edge_aware:
        in_row_bytes += Ci * jnp.dtype(img.dtype).itemsize * W
    live_row_bytes = 8 * W * 4                    # peak live f32 slab temporaries / row
    per_row = 2 * in_row_bytes + live_row_bytes   # 2x: double-buffered input tiles

    headroom = 8 << 20                            # compiler scratch / semaphores
    usable = max(16 << 20, min(cap - headroom, 100 << 20))
    fixed = 2 * in_row_bytes * align + 2 * 8 * W * 4 + (2 << 20)
    max_rows = max(align, (usable - fixed) // per_row)

    # ---- choose tile_h (arbitrary H supported via masked tail rows) ----
    if tile_h is not None:
        th = int(tile_h)
        if th != H and (th < align or th > H or th % align != 0):
            th = None                             # invalid override -> auto
        tile_h = th
    if tile_h is None:
        if max_rows >= H:
            tile_h = H
        else:
            tile_h = max(align, min((max_rows // align) * align,
                                    (H // align) * align))
    n_h = _cdiv(H, tile_h)

    # Megacore (v4 / v7x): a single-frame call must expose 2-way parallel work.
    if cores >= 2 and N == 1:
        if n_h == 1 and H > align:
            tile_h = _round_up(_cdiv(H, 2), align)        # exactly 2 tiles
        elif n_h > 1 and n_h % 2 == 1:
            t = tile_h
            for _ in range(32):                           # shrink to an even tile count
                t -= align
                if t < align:
                    break
                if _cdiv(H, t) % 2 == 0:
                    tile_h = t
                    break
        n_h = _cdiv(H, tile_h)

    has_halo = n_h > 1
    n_outer = 2 if (cores >= 2 and N == 1 and n_h >= 2 and n_h % 2 == 0) else 1
    n_h_inner = n_h // n_outer
    n_partials = N * n_outer
    acc_rows = 8 if tile_h % 8 == 0 else tile_h

    def main_map(b, o, j):
        return (b, 0, o * n_h_inner + j, 0)

    in_arrays = [flow]
    in_specs = [pl.BlockSpec((1, Cf, tile_h, W), main_map)]
    if edge_aware:
        in_arrays.append(img)
        in_specs.append(pl.BlockSpec((1, Ci, tile_h, W), main_map))
    if has_halo:
        halo_rows = align                         # minimal legal block height
        n_halo_blocks = _cdiv(H, halo_rows)
        blocks_per_tile = tile_h // halo_rows

        def halo_map(b, o, j):
            h_tile = o * n_h_inner + j
            nxt = jnp.minimum((h_tile + 1) * blocks_per_tile, n_halo_blocks - 1)
            return (b, 0, nxt, 0)

        in_arrays.append(flow)
        in_specs.append(pl.BlockSpec((1, Cf, halo_rows, W), halo_map))
        if edge_aware:
            in_arrays.append(img)
            in_specs.append(pl.BlockSpec((1, Ci, halo_rows, W), halo_map))

    out_map = lambda b, o, j: (b * n_outer + o, 0, 0)
    out_shape = (jax.ShapeDtypeStruct((n_partials, 1, 1), jnp.float32),
                 jax.ShapeDtypeStruct((n_partials, 1, 1), jnp.float32))
    out_specs = [pl.BlockSpec((1, 1, 1), out_map),
                 pl.BlockSpec((1, 1, 1), out_map)]

    scratch_shapes = [pltpu.VMEM((acc_rows, W), jnp.float32),
                      pltpu.VMEM((acc_rows, W), jnp.float32)]

    # Scoped-VMEM limit from the actual buffer sizes (real itemsizes), with headroom.
    halo_bytes = 2 * in_row_bytes * align if has_halo else 0
    needed = (2 * in_row_bytes * tile_h + halo_bytes
              + live_row_bytes * tile_h + 2 * acc_rows * W * 4 + (4 << 20))
    vmem_limit = int(min(usable, max(needed, 24 << 20)))

    kernel = functools.partial(
        _smoothness_kernel,
        wsq=float(weight) ** 2,
        edge_aware=bool(edge_aware),
        has_halo=has_halo,
        H=H,
        n_h_inner=n_h_inner,
        acc_rows=acc_rows)

    sum_gh, sum_gw = pl.pallas_call(
        kernel,
        out_shape=out_shape,
        grid_spec=pltpu.PrefetchScalarGridSpec(
            num_scalar_prefetch=0,
            grid=(N, n_outer, n_h_inner),
            in_specs=in_specs,
            out_specs=out_specs,
            scratch_shapes=scratch_shapes,
        ),
        compiler_params=pltpu.CompilerParams(
            dimension_semantics=("parallel", "parallel", "arbitrary"),
            vmem_limit_bytes=vmem_limit,
        ),
    )(*in_arrays)

    cnt_gh = N * Cf * (H - 1) * W
    cnt_gw = N * Cf * H * (W - 1)
    return 0.5 * (jnp.sum(sum_gh) / cnt_gh + jnp.sum(sum_gw) / cnt_gw)


def set_smoothness_loss_ref(flow, img, weight=150.0, edge_aware=True):
    """Pure-JAX reference mirroring the PyTorch forward exactly."""
    flow = flow.astype(jnp.float32)
    img = img.astype(jnp.float32)
    wsq = float(weight) ** 2
    img_gh = jnp.mean((img[:, :, 1:, :] - img[:, :, :-1, :]) ** 2, axis=1, keepdims=True)
    img_gw = jnp.mean((img[:, :, :, 1:] - img[:, :, :, :-1]) ** 2, axis=1, keepdims=True)
    weight_gh = jnp.exp(-wsq * img_gh)
    weight_gw = jnp.exp(-wsq * img_gw)
    flow_gh = jnp.abs(flow[:, :, 1:, :] - flow[:, :, :-1, :])
    flow_gw = jnp.abs(flow[:, :, :, 1:] - flow[:, :, :, :-1])
    if edge_aware:
        return (jnp.mean(weight_gh * flow_gh) + jnp.mean(weight_gw * flow_gw)) * 0.5
    return (jnp.mean(flow_gh) + jnp.mean(flow_gw)) * 0.5


if __name__ == "__main__":
    key = jax.random.PRNGKey(0)
    k_flow, k_img = jax.random.split(key)

    # flow has 2 channels (u, v), img has 3 channels (RGB); small frame.
    N, Cf, Ci, H, W = 2, 2, 3, 16, 128
    flow = jax.random.normal(k_flow, (N, Cf, H, W), dtype=jnp.float32)
    # keep neighbour differences small so exp(-22500 * d^2) is non-degenerate
    img = 0.02 * jax.random.uniform(k_img, (N, Ci, H, W), dtype=jnp.float32)

    ref_ea = set_smoothness_loss_ref(flow, img, weight=150.0, edge_aware=True)
    ref_na = set_smoothness_loss_ref(flow, img, weight=150.0, edge_aware=False)

    # 1) default auto tiling
    f_default = jax.jit(lambda f, i: set_smoothness_loss_pallas(
        f, i, weight=150.0, edge_aware=True))
    out = jax.block_until_ready(f_default(flow, img))
    assert jnp.allclose(out, ref_ea, rtol=1e-4, atol=1e-6), (float(out), float(ref_ea))

    # 2) forced spatial tiling (tile_h=8 -> 2 H tiles, halo path + accumulation)
    f_tiled = jax.jit(lambda f, i: set_smoothness_loss_pallas(
        f, i, weight=150.0, edge_aware=True, tile_h=8))
    out = jax.block_until_ready(f_tiled(flow, img))
    assert jnp.allclose(out, ref_ea, rtol=1e-4, atol=1e-6), (float(out), float(ref_ea))

    # 3) edge_aware=False specialisation (img never read by the kernel)
    f_noedge = jax.jit(lambda f, i: set_smoothness_loss_pallas(
        f, i, weight=150.0, edge_aware=False))
    out = jax.block_until_ready(f_noedge(flow, img))
    assert jnp.allclose(out, ref_na, rtol=1e-4, atol=1e-6), (float(out), float(ref_na))

    # 4) single-frame call (exercises the megacore even-split path on 2-core chips)
    flow1, img1 = flow[:1], img[:1]
    ref1 = set_smoothness_loss_ref(flow1, img1, weight=150.0, edge_aware=True)
    out = jax.block_until_ready(f_default(flow1, img1))
    assert jnp.allclose(out, ref1, rtol=1e-4, atol=1e-6), (float(out), float(ref1))

    # 5) bf16 inputs DMA'd as-is (no wrapper-side f32 copies), cast in-kernel
    flow_bf = flow.astype(jnp.bfloat16)
    img_bf = img.astype(jnp.bfloat16)
    ref_bf = set_smoothness_loss_ref(flow_bf, img_bf, weight=150.0, edge_aware=True)
    out = jax.block_until_ready(f_default(flow_bf, img_bf))
    assert jnp.allclose(out, ref_bf, rtol=1e-4, atol=1e-6), (float(out), float(ref_bf))

    print("KERNEL_OK")
</pallas_src>

<mosaic_0001>
module attributes {stable_mosaic.version = 11 : i64} {
  func.func @_smoothness_kernel(%arg0: i32, %arg1: i32, %arg2: i32, %arg3: memref<1x2x16x128xf32, #tpu.memory_space<vmem>>, %arg4: memref<1x3x16x128xf32, #tpu.memory_space<vmem>>, %arg5: memref<1x1x1xf32, #tpu.memory_space<vmem>>, %arg6: memref<1x1x1xf32, #tpu.memory_space<vmem>>, %arg7: memref<8x128xf32, #tpu.memory_space<vmem>>, %arg8: memref<8x128xf32, #tpu.memory_space<vmem>>) attributes {dimension_semantics = [#tpu.dimension_semantics<parallel>, #tpu.dimension_semantics<parallel>, #tpu.dimension_semantics<arbitrary>], iteration_bounds = array<i64: 2, 1, 1>, scalar_prefetch = 0 : i64, scratch_operands = 2 : i64, tpu.core_type = #tpu.core_type<tc>, window_params = [{transform_indices = @transform_0, window_bounds = array<i64: 1, 2, 16, 128>}, {transform_indices = @transform_1, window_bounds = array<i64: 1, 3, 16, 128>}, {transform_indices = @transform_2, window_bounds = array<i64: 1, 1, 1>}, {transform_indices = @transform_3, window_bounds = array<i64: 1, 1, 1>}]} {
    %c1_i32 = arith.constant 1 : i32
    %0 = arith.muli %arg1, %c1_i32 : i32
    %1 = arith.addi %0, %arg2 : i32
    %c0_i32 = arith.constant 0 : i32
    %2 = arith.cmpi eq, %arg2, %c0_i32 : i32
    %3 = arith.extui %2 : i1 to i32
    %c0_i32_0 = arith.constant 0 : i32
    %4 = arith.cmpi ne, %3, %c0_i32_0 : i32
    scf.if %4 {
      %cst_65 = arith.constant 0.000000e+00 : f32
      %100 = vector.broadcast %cst_65 : f32 to vector<8x128xf32>
      %c0_66 = arith.constant 0 : index
      %c0_67 = arith.constant 0 : index
      %101 = vector.load %arg7[%c0_66, %c0_67] : memref<8x128xf32, #tpu.memory_space<vmem>>, vector<8x128xf32>
      tpu.vector_store %arg7[%c0_66, %c0_67], %100 {strides = array<i32>} : memref<8x128xf32, #tpu.memory_space<vmem>>, vector<8x128xf32>,
      %cst_68 = arith.constant 0.000000e+00 : f32
      %102 = vector.broadcast %cst_68 : f32 to vector<8x128xf32>
      %c0_69 = arith.constant 0 : index
      %c0_70 = arith.constant 0 : index
      %103 = vector.load %arg8[%c0_69, %c0_70] : memref<8x128xf32, #tpu.memory_space<vmem>>, vector<8x128xf32>
      tpu.vector_store %arg8[%c0_69, %c0_70], %102 {strides = array<i32>} : memref<8x128xf32, #tpu.memory_space<vmem>>, vector<8x128xf32>,
    } else {
    }
    %5 = tpu.iota {dimensions = array<i32: 0>} : vector<16x128xi32>
    %6 = tpu.iota {dimensions = array<i32: 1>} : vector<16x128xi32>
    %c16_i32 = arith.constant 16 : i32
    %7 = arith.muli %1, %c16_i32 : i32
    %8 = vector.broadcast %7 : i32 to vector<16x128xi32>
    %9 = arith.addi %5, %8 : vector<16x128xi32>
    %c1_i32_1 = arith.constant 1 : i32
    %10 = vector.broadcast %c1_i32_1 : i32 to vector<16x128xi32>
    %11 = arith.addi %9, %10 : vector<16x128xi32>
    %c16_i32_2 = arith.constant 16 : i32
    %12 = vector.broadcast %c16_i32_2 : i32 to vector<16x128xi32>
    %13 = arith.cmpi slt, %11, %12 : vector<16x128xi32>
    %c16_i32_3 = arith.constant 16 : i32
    %14 = vector.broadcast %c16_i32_3 : i32 to vector<16x128xi32>
    %15 = arith.cmpi slt, %9, %14 : vector<16x128xi32>
    %c127_i32 = arith.constant 127 : i32
    %16 = vector.broadcast %c127_i32 : i32 to vector<16x128xi32>
    %17 = arith.cmpi slt, %6, %16 : vector<16x128xi32>
    %18 = arith.andi %15, %17 : vector<16x128xi1>
    %c0 = arith.constant 0 : index
    %c0_4 = arith.constant 0 : index
    %c0_5 = arith.constant 0 : index
    %c0_6 = arith.constant 0 : index
    %19 = vector.load %arg3[%c0, %c0_4, %c0_5, %c0_6] : memref<1x2x16x128xf32, #tpu.memory_space<vmem>>, vector<1x1x16x128xf32>
    %20 = vector.shape_cast %19 : vector<1x1x16x128xf32> to vector<16x128xf32>
    %c15_i32 = arith.constant 15 : i32
    %21 = tpu.dynamic_rotate %20 by %c15_i32 dim 0 : vector<16x128xf32>, i32 -> vector<16x128xf32>
    %22 = arith.subf %21, %20 : vector<16x128xf32>
    %23 = math.absf %22 : vector<16x128xf32>
    %c0_7 = arith.constant 0 : index
    %c1 = arith.constant 1 : index
    %c0_8 = arith.constant 0 : index
    %c0_9 = arith.constant 0 : index
    %24 = vector.load %arg3[%c0_7, %c1, %c0_8, %c0_9] : memref<1x2x16x128xf32, #tpu.memory_space<vmem>>, vector<1x1x16x128xf32>
    %25 = vector.shape_cast %24 : vector<1x1x16x128xf32> to vector<16x128xf32>
    %c15_i32_10 = arith.constant 15 : i32
    %26 = tpu.dynamic_rotate %25 by %c15_i32_10 dim 0 : vector<16x128xf32>, i32 -> vector<16x128xf32>
    %27 = arith.subf %26, %25 : vector<16x128xf32>
    %28 = math.absf %27 : vector<16x128xf32>
    %29 = arith.addf %23, %28 : vector<16x128xf32>
    %c0_11 = arith.constant 0 : index
    %c0_12 = arith.constant 0 : index
    %c0_13 = arith.constant 0 : index
    %c0_14 = arith.constant 0 : index
    %30 = vector.load %arg4[%c0_11, %c0_12, %c0_13, %c0_14] : memref<1x3x16x128xf32, #tpu.memory_space<vmem>>, vector<1x1x16x128xf32>
    %31 = vector.shape_cast %30 : vector<1x1x16x128xf32> to vector<16x128xf32>
    %c15_i32_15 = arith.constant 15 : i32
    %32 = tpu.dynamic_rotate %31 by %c15_i32_15 dim 0 : vector<16x128xf32>, i32 -> vector<16x128xf32>
    %33 = arith.subf %32, %31 : vector<16x128xf32>
    %34 = arith.mulf %33, %33 : vector<16x128xf32>
    %c0_16 = arith.constant 0 : index
    %c1_17 = arith.constant 1 : index
    %c0_18 = arith.constant 0 : index
    %c0_19 = arith.constant 0 : index
    %35 = vector.load %arg4[%c0_16, %c1_17, %c0_18, %c0_19] : memref<1x3x16x128xf32, #tpu.memory_space<vmem>>, vector<1x1x16x128xf32>
    %36 = vector.shape_cast %35 : vector<1x1x16x128xf32> to vector<16x128xf32>
    %c15_i32_20 = arith.constant 15 : i32
    %37 = tpu.dynamic_rotate %36 by %c15_i32_20 dim 0 : vector<16x128xf32>, i32 -> vector<16x128xf32>
    %38 = arith.subf %37, %36 : vector<16x128xf32>
    %39 = arith.mulf %38, %38 : vector<16x128xf32>
    %40 = arith.addf %34, %39 : vector<16x128xf32>
    %c0_21 = arith.constant 0 : index
    %c2 = arith.constant 2 : index
    %c0_22 = arith.constant 0 : index
    %c0_23 = arith.constant 0 : index
    %41 = vector.load %arg4[%c0_21, %c2, %c0_22, %c0_23] : memref<1x3x16x128xf32, #tpu.memory_space<vmem>>, vector<1x1x16x128xf32>
    %42 = vector.shape_cast %41 : vector<1x1x16x128xf32> to vector<16x128xf32>
    %c15_i32_24 = arith.constant 15 : i32
    %43 = tpu.dynamic_rotate %42 by %c15_i32_24 dim 0 : vector<16x128xf32>, i32 -> vector<16x128xf32>
    %44 = arith.subf %43, %42 : vector<16x128xf32>
    %45 = arith.mulf %44, %44 : vector<16x128xf32>
    %46 = arith.addf %40, %45 : vector<16x128xf32>
    %cst = arith.constant -7.500000e+03 : f32
    %47 = vector.broadcast %cst : f32 to vector<16x128xf32>
    %48 = arith.mulf %46, %47 : vector<16x128xf32>
    %49 = math.exp %48 : vector<16x128xf32>
    %50 = arith.mulf %49, %29 : vector<16x128xf32>
    %c0_25 = arith.constant 0 : index
    %c0_26 = arith.constant 0 : index
    %51 = vector.load %arg7[%c0_25, %c0_26] : memref<8x128xf32, #tpu.memory_space<vmem>>, vector<8x128xf32>
    %cst_27 = arith.constant 0.000000e+00 : f32
    %52 = vector.broadcast %cst_27 : f32 to vector<16x128xf32>
    %53 = arith.select %13, %50, %52 : vector<16x128xi1>, vector<16x128xf32>
    %54 = vector.shape_cast %53 : vector<16x128xf32> to vector<2x8x128xf32>
    %cst_28 = arith.constant dense<0.000000e+00> : vector<8x128xf32>
    %55 = vector.multi_reduction <add>, %54, %cst_28 [0] : vector<2x8x128xf32> to vector<8x128xf32>
    %56 = arith.addf %51, %55 : vector<8x128xf32>
    %c0_29 = arith.constant 0 : index
    %c0_30 = arith.constant 0 : index
    %57 = vector.load %arg7[%c0_29, %c0_30] : memref<8x128xf32, #tpu.memory_space<vmem>>, vector<8x128xf32>
    tpu.vector_store %arg7[%c0_29, %c0_30], %56 {strides = array<i32>} : memref<8x128xf32, #tpu.memory_space<vmem>>, vector<8x128xf32>,
    %c0_31 = arith.constant 0 : index
    %c0_32 = arith.constant 0 : index
    %c0_33 = arith.constant 0 : index
    %c0_34 = arith.constant 0 : index
    %58 = vector.load %arg3[%c0_31, %c0_32, %c0_33, %c0_34] : memref<1x2x16x128xf32, #tpu.memory_space<vmem>>, vector<1x1x16x128xf32>
    %59 = vector.shape_cast %58 : vector<1x1x16x128xf32> to vector<16x128xf32>
    %c127_i32_35 = arith.constant 127 : i32
    %60 = tpu.dynamic_rotate %59 by %c127_i32_35 dim 1 : vector<16x128xf32>, i32 -> vector<16x128xf32>
    %61 = arith.subf %60, %59 : vector<16x128xf32>
    %62 = math.absf %61 : vector<16x128xf32>
    %c0_36 = arith.constant 0 : index
    %c1_37 = arith.constant 1 : index
    %c0_38 = arith.constant 0 : index
    %c0_39 = arith.constant 0 : index
    %63 = vector.load %arg3[%c0_36, %c1_37, %c0_38, %c0_39] : memref<1x2x16x128xf32, #tpu.memory_space<vmem>>, vector<1x1x16x128xf32>
    %64 = vector.shape_cast %63 : vector<1x1x16x128xf32> to vector<16x128xf32>
    %c127_i32_40 = arith.constant 127 : i32
    %65 = tpu.dynamic_rotate %64 by %c127_i32_40 dim 1 : vector<16x128xf32>, i32 -> vector<16x128xf32>
    %66 = arith.subf %65, %64 : vector<16x128xf32>
    %67 = math.absf %66 : vector<16x128xf32>
    %68 = arith.addf %62, %67 : vector<16x128xf32>
    %c0_41 = arith.constant 0 : index
    %c0_42 = arith.constant 0 : index
    %c0_43 = arith.constant 0 : index
    %c0_44 = arith.constant 0 : index
    %69 = vector.load %arg4[%c0_41, %c0_42, %c0_43, %c0_44] : memref<1x3x16x128xf32, #tpu.memory_space<vmem>>, vector<1x1x16x128xf32>
    %70 = vector.shape_cast %69 : vector<1x1x16x128xf32> to vector<16x128xf32>
    %c127_i32_45 = arith.constant 127 : i32
    %71 = tpu.dynamic_rotate %70 by %c127_i32_45 dim 1 : vector<16x128xf32>, i32 -> vector<16x128xf32>
    %72 = arith.subf %71, %70 : vector<16x128xf32>
    %73 = arith.mulf %72, %72 : vector<16x128xf32>
    %c0_46 = arith.constant 0 : index
    %c1_47 = arith.constant 1 : index
    %c0_48 = arith.constant 0 : index
    %c0_49 = arith.constant 0 : index
    %74 = vector.load %arg4[%c0_46, %c1_47, %c0_48, %c0_49] : memref<1x3x16x128xf32, #tpu.memory_space<vmem>>, vector<1x1x16x128xf32>
    %75 = vector.shape_cast %74 : vector<1x1x16x128xf32> to vector<16x128xf32>
    %c127_i32_50 = arith.constant 127 : i32
    %76 = tpu.dynamic_rotate %75 by %c127_i32_50 dim 1 : vector<16x128xf32>, i32 -> vector<16x128xf32>
    %77 = arith.subf %76, %75 : vector<16x128xf32>
    %78 = arith.mulf %77, %77 : vector<16x128xf32>
    %79 = arith.addf %73, %78 : vector<16x128xf32>
    %c0_51 = arith.constant 0 : index
    %c2_52 = arith.constant 2 : index
    %c0_53 = arith.constant 0 : index
    %c0_54 = arith.constant 0 : index
    %80 = vector.load %arg4[%c0_51, %c2_52, %c0_53, %c0_54] : memref<1x3x16x128xf32, #tpu.memory_space<vmem>>, vector<1x1x16x128xf32>
    %81 = vector.shape_cast %80 : vector<1x1x16x128xf32> to vector<16x128xf32>
    %c127_i32_55 = arith.constant 127 : i32
    %82 = tpu.dynamic_rotate %81 by %c127_i32_55 dim 1 : vector<16x128xf32>, i32 -> vector<16x128xf32>
    %83 = arith.subf %82, %81 : vector<16x128xf32>
    %84 = arith.mulf %83, %83 : vector<16x128xf32>
    %85 = arith.addf %79, %84 : vector<16x128xf32>
    %cst_56 = arith.constant -7.500000e+03 : f32
    %86 = vector.broadcast %cst_56 : f32 to vector<16x128xf32>
    %87 = arith.mulf %85, %86 : vector<16x128xf32>
    %88 = math.exp %87 : vector<16x128xf32>
    %89 = arith.mulf %88, %68 : vector<16x128xf32>
    %c0_57 = arith.constant 0 : index
    %c0_58 = arith.constant 0 : index
    %90 = vector.load %arg8[%c0_57, %c0_58] : memref<8x128xf32, #tpu.memory_space<vmem>>, vector<8x128xf32>
    %cst_59 = arith.constant 0.000000e+00 : f32
    %91 = vector.broadcast %cst_59 : f32 to vector<16x128xf32>
    %92 = arith.select %18, %89, %91 : vector<16x128xi1>, vector<16x128xf32>
    %93 = vector.shape_cast %92 : vector<16x128xf32> to vector<2x8x128xf32>
    %cst_60 = arith.constant dense<0.000000e+00> : vector<8x128xf32>
    %94 = vector.multi_reduction <add>, %93, %cst_60 [0] : vector<2x8x128xf32> to vector<8x128xf32>
    %95 = arith.addf %90, %94 : vector<8x128xf32>
    %c0_61 = arith.constant 0 : index
    %c0_62 = arith.constant 0 : index
    %96 = vector.load %arg8[%c0_61, %c0_62] : memref<8x128xf32, #tpu.memory_space<vmem>>, vector<8x128xf32>
    tpu.vector_store %arg8[%c0_61, %c0_62], %95 {strides = array<i32>} : memref<8x128xf32, #tpu.memory_space<vmem>>, vector<8x128xf32>,
    %c0_i32_63 = arith.constant 0 : i32
    %97 = arith.cmpi eq, %arg2, %c0_i32_63 : i32
    %98 = arith.extui %97 : i1 to i32
    %c0_i32_64 = arith.constant 0 : i32
    %99 = arith.cmpi ne, %98, %c0_i32_64 : i32
    scf.if %99 {
      %c0_65 = arith.constant 0 : index
      %c0_66 = arith.constant 0 : index
      %100 = vector.load %arg7[%c0_65, %c0_66] : memref<8x128xf32, #tpu.memory_space<vmem>>, vector<8x128xf32>
      %101 = vector.shape_cast %100 : vector<8x128xf32> to vector<1x8x128xf32>
      %cst_67 = arith.constant dense<0.000000e+00> : vector<1xf32>
      %102 = vector.multi_reduction <add>, %101, %cst_67 [1, 2] : vector<1x8x128xf32> to vector<1xf32>
      %103 = vector.shape_cast %102 : vector<1xf32> to vector<1x1x1xf32>
      %104 = vector.extract %103[0, 0, 0] : f32 from vector<1x1x1xf32>
      %105 = vector.broadcast %104 : f32 to vector<1x1x1xf32>
      %c0_68 = arith.constant 0 : index
      %c0_69 = arith.constant 0 : index
      %c0_70 = arith.constant 0 : index
      %106 = vector.load %arg5[%c0_68, %c0_69, %c0_70] : memref<1x1x1xf32, #tpu.memory_space<vmem>>, vector<1x1x1xf32>
      tpu.vector_store %arg5[%c0_68, %c0_69, %c0_70], %105 {strides = array<i32>} : memref<1x1x1xf32, #tpu.memory_space<vmem>>, vector<1x1x1xf32>,
      %c0_71 = arith.constant 0 : index
      %c0_72 = arith.constant 0 : index
      %107 = vector.load %arg8[%c0_71, %c0_72] : memref<8x128xf32, #tpu.memory_space<vmem>>, vector<8x128xf32>
      %108 = vector.shape_cast %107 : vector<8x128xf32> to vector<1x8x128xf32>
      %cst_73 = arith.constant dense<0.000000e+00> : vector<1xf32>
      %109 = vector.multi_reduction <add>, %108, %cst_73 [1, 2] : vector<1x8x128xf32> to vector<1xf32>
      %110 = vector.shape_cast %109 : vector<1xf32> to vector<1x1x1xf32>
      %111 = vector.extract %110[0, 0, 0] : f32 from vector<1x1x1xf32>
      %112 = vector.broadcast %111 : f32 to vector<1x1x1xf32>
      %c0_74 = arith.constant 0 : index
      %c0_75 = arith.constant 0 : index
      %c0_76 = arith.constant 0 : index
      %113 = vector.load %arg6[%c0_74, %c0_75, %c0_76] : memref<1x1x1xf32, #tpu.memory_space<vmem>>, vector<1x1x1xf32>
      tpu.vector_store %arg6[%c0_74, %c0_75, %c0_76], %112 {strides = array<i32>} : memref<1x1x1xf32, #tpu.memory_space<vmem>>, vector<1x1x1xf32>,
    } else {
    }
    return
  }
  func.func @transform_0(%arg0: i32, %arg1: i32, %arg2: i32) -> (i32, i32, i32, i32) {
    %c1_i32 = arith.constant 1 : i32
    %0 = arith.muli %arg1, %c1_i32 : i32
    %1 = arith.addi %0, %arg2 : i32
    %c0_i32 = arith.constant 0 : i32
    %c0_i32_0 = arith.constant 0 : i32
    %c0_i32_1 = arith.constant 0 : i32
    return %arg0, %c0_i32, %1, %c0_i32_0 : i32, i32, i32, i32
  }
  func.func @transform_1(%arg0: i32, %arg1: i32, %arg2: i32) -> (i32, i32, i32, i32) {
    %c1_i32 = arith.constant 1 : i32
    %0 = arith.muli %arg1, %c1_i32 : i32
    %1 = arith.addi %0, %arg2 : i32
    %c0_i32 = arith.constant 0 : i32
    %c0_i32_0 = arith.constant 0 : i32
    %c0_i32_1 = arith.constant 0 : i32
    return %arg0, %c0_i32, %1, %c0_i32_0 : i32, i32, i32, i32
  }
  func.func @transform_2(%arg0: i32, %arg1: i32, %arg2: i32) -> (i32, i32, i32) {
    %c1_i32 = arith.constant 1 : i32
    %0 = arith.muli %arg0, %c1_i32 : i32
    %1 = arith.addi %0, %arg1 : i32
    %c0_i32 = arith.constant 0 : i32
    %c0_i32_0 = arith.constant 0 : i32
    %c0_i32_1 = arith.constant 0 : i32
    return %1, %c0_i32, %c0_i32_0 : i32, i32, i32
  }
  func.func @transform_3(%arg0: i32, %arg1: i32, %arg2: i32) -> (i32, i32, i32) {
    %c1_i32 = arith.constant 1 : i32
    %0 = arith.muli %arg0, %c1_i32 : i32
    %1 = arith.addi %0, %arg1 : i32
    %c0_i32 = arith.constant 0 : i32
    %c0_i32_0 = arith.constant 0 : i32
    %c0_i32_1 = arith.constant 0 : i32
    return %1, %c0_i32, %c0_i32_0 : i32, i32, i32
  }
}

</mosaic_0001>

<llo_original>
// kernel: _lambda_.1
$region0: #{_lambda_.1}
  #allocation0 [shape = 'u32[]', space=smem, size = 0x4, offset = 0x4, fixed_abs, tag = 'smem constant byte address 0x4 - core index']
  #allocation1 [shape = 'u32[72,128]{1,0:T(1,128)}', space=vmem, size = 0x9000, scoped, tag = 'internal scratch']
  #allocation2 [shape = 'f32[8,128]{1,0:T(8,128)}', space=vmem, size = 0x1000, scoped, tag = 'scratch operand']
  #allocation3 [shape = 'f32[8,128]{1,0:T(8,128)}', space=vmem, size = 0x1000, scoped, tag = 'scratch operand']
  %s0 = inlined_call_operand.hbm [shape: f32[2,2,16,128], index: 0, kind: input, shape index: {}]
  %s1 = inlined_call_operand.hbm [shape: f32[2,3,16,128], index: 1, kind: input, shape index: {}]
  %s2 = inlined_call_operand.vmem [shape: f32[2,1,1], index: 2, kind: output, shape index: {0}]
  %s3 = inlined_call_operand.vmem [shape: f32[2,1,1], index: 3, kind: output, shape index: {1}]
  %4 = xla_tuple %s2, %s3
  %s5 = sld [smem:[#allocation0]]
  $region65: #{_lambda_.1} parent=0
    _
  %s7 = ssub.s32 1, %s5
  %s8 = scalar_select 0, %s7, %s5
  $region1: #{_lambda_.1} parent=0
    #allocation4 [shape = 'u8[32768]{0}', space=vmem, size = 0x8000, scoped, tag = 'input window, operand 0']
    #allocation5 [shape = 's32[2]{0}', space=sflag, size = 0x8, scoped, tag = 'scoped memory for _lambda_.1']
    #allocation6 [shape = 'u8[49152]{0}', space=vmem, size = 0xc000, scoped, tag = 'input window, operand 1']
    #allocation7 [shape = 's32[2]{0}', space=sflag, size = 0x8, scoped, tag = 'scoped memory for _lambda_.1']
    %9 = vsyncpa [#allocation5], 0
    %s10 = scalar_lea.sflag [#allocation5], 1
    %11 = vsyncpa %s10, 0
    %12 = vsyncpa [#allocation7], 0
    %s13 = scalar_lea.sflag [#allocation7], 1
    %14 = vsyncpa %s13, 0
    loop: start=0, step=1, limit=4
    $region2: #{_lambda_.1} parent=1 // loop_pre_header
      _
    $region3: #{_lambda_.1} parent=1 // loop_header
      %s16 = sphi 0, %s20
      %p17 = scmp.ge.s32.totalorder %s16, 4
      %s23 = sphi 0, %s42
      %s24 = sphi 0, %s38
      %s25 = sphi 0, %s34
      %s26 = sphi 0, %s23
      %s27 = sphi 0, %s24
      %s28 = sphi 0, %s25
      %s29 = sphi 0, %s26
      %s30 = sphi 0, %s27
      %s31 = sphi 0, %s28
      %s49 = sphi 0, %s51
      %s52 = sphi 0, %s49
      %s53 = sphi 0, %s52
      %s69 = sphi 0, %s53
      %s79 = sphi 0, %s81
      %s82 = sphi 0, %s79
      %s83 = sphi 0, %s82
      %s99 = sphi 0, %s83
      %s107 = sphi 0, %s109
      %s110 = sphi 0, %s107
      %s111 = sphi 0, %s110
      %s127 = sphi 0, %s111
      %s135 = sphi 0, %s137
      %s138 = sphi 0, %s135
      %s139 = sphi 0, %s138
      %s155 = sphi 0, %s139
    $region4: #{_lambda_.1} parent=1 // loop_header_branch
      %19 = sbr.rel (%p17) target = $region8
    $region5: #{_lambda_.1} parent=1 // loop_body
      %s21 = ssub.s32 %s16, 1
      %s22 = ssub.s32 %s16, 2
      %s32 = sadd.s32 1, %s25
      %p33 = scmp.ge.s32.totalorder %s32, 1
      %s34 = scalar_select %p33, 0, %s32
      %s35 = sadd.s32 1, %s24
      %s36 = scalar_select %p33, %s35, %s24
      %p37 = scmp.ge.s32.totalorder %s36, 1
      %s38 = scalar_select %p37, 0, %s36
      %s39 = sadd.s32 1, %s23
      %s40 = scalar_select %p37, %s39, %s23
      %p41 = scmp.ge.s32.totalorder %s40, 2
      %s42 = scalar_select %p41, 0, %s40
      %s43 = sadd.s32 %s24, %s25
      %s44 = sadd.s32 %s38, %s34
      %s45 = ssub.s32 %s23, %s42
      %s46 = ssub.s32 %s43, %s44
      %s47 = sor.u32 %s45, %s46
      %p48 = scmp.eq.s32.totalorder %s47, 0
      %s50 = sadd.s32 %s49, 1
      %s51 = scalar_select %p48, %s49, %s50
      %p54 = pneg %p48
      %p55 = scmp.eq.s32.totalorder %s16, 1
      %p56 = por %p54, %p55
      %p57 = scmp.ne.s32.totalorder %s49, %s52
      %p58 = scmp.eq.s32.totalorder %s16, 0
      %p59 = por %p57, %p58
      %p60 = scmp.ne.s32.totalorder %s49, %s52
      %p61 = scmp.eq.s32.totalorder %s21, 1
      %p62 = por %p60, %p61
      %p63 = scmp.ne.s32.totalorder %s52, %s53
      %p64 = scmp.eq.s32.totalorder %s21, 0
      %p65 = por %p63, %p64
      %p66 = scmp.ne.s32.totalorder %s52, %s53
      %p67 = scmp.eq.s32.totalorder %s22, 1
      %p68 = por %p66, %p67
      %p70 = scmp.ne.s32.totalorder %s53, %s69
      %p71 = scmp.eq.s32.totalorder %s22, 0
      %p72 = por %p70, %p71
      %s73 = sadd.s32 %s24, %s25
      %s74 = sadd.s32 %s38, %s34
      %s75 = ssub.s32 %s23, %s42
      %s76 = ssub.s32 %s73, %s74
      %s77 = sor.u32 %s75, %s76
      %p78 = scmp.eq.s32.totalorder %s77, 0
      %s80 = sadd.s32 %s79, 1
      %s81 = scalar_select %p78, %s79, %s80
      %p84 = pneg %p78
      %p85 = scmp.eq.s32.totalorder %s16, 1
      %p86 = por %p84, %p85
      %p87 = scmp.ne.s32.totalorder %s79, %s82
      %p88 = scmp.eq.s32.totalorder %s16, 0
      %p89 = por %p87, %p88
      %p90 = scmp.ne.s32.totalorder %s79, %s82
      %p91 = scmp.eq.s32.totalorder %s21, 1
      %p92 = por %p90, %p91
      %p93 = scmp.ne.s32.totalorder %s82, %s83
      %p94 = scmp.eq.s32.totalorder %s21, 0
      %p95 = por %p93, %p94
      %p96 = scmp.ne.s32.totalorder %s82, %s83
      %p97 = scmp.eq.s32.totalorder %s22, 1
      %p98 = por %p96, %p97
      %p100 = scmp.ne.s32.totalorder %s83, %s99
      %p101 = scmp.eq.s32.totalorder %s22, 0
      %p102 = por %p100, %p101
      %s103 = sadd.s32 %s23, %s24
      %s104 = sadd.s32 %s42, %s38
      %s105 = ssub.s32 %s103, %s104
      %p106 = scmp.eq.s32.totalorder %s105, 0
      %s108 = sadd.s32 %s107, 1
      %s109 = scalar_select %p106, %s107, %s108
      %p112 = pneg %p106
      %p113 = scmp.eq.s32.totalorder %s16, 1
      %p114 = por %p112, %p113
      %p115 = scmp.ne.s32.totalorder %s107, %s110
      %p116 = scmp.eq.s32.totalorder %s16, 0
      %p117 = por %p115, %p116
      %p118 = scmp.ne.s32.totalorder %s107, %s110
      %p119 = scmp.eq.s32.totalorder %s21, 1
      %p120 = por %p118, %p119
      %p121 = scmp.ne.s32.totalorder %s110, %s111
      %p122 = scmp.eq.s32.totalorder %s21, 0
      %p123 = por %p121, %p122
      %p124 = scmp.ne.s32.totalorder %s110, %s111
      %p125 = scmp.eq.s32.totalorder %s22, 1
      %p126 = por %p124, %p125
      %p128 = scmp.ne.s32.totalorder %s111, %s127
      %p129 = scmp.eq.s32.totalorder %s22, 0
      %p130 = por %p128, %p129
      %s131 = sadd.s32 %s23, %s24
      %s132 = sadd.s32 %s42, %s38
      %s133 = ssub.s32 %s131, %s132
      %p134 = scmp.eq.s32.totalorder %s133, 0
      %s136 = sadd.s32 %s135, 1
      %s137 = scalar_select %p134, %s135, %s136
      %p140 = pneg %p134
      %p141 = scmp.eq.s32.totalorder %s16, 1
      %p142 = por %p140, %p141
      %p143 = scmp.ne.s32.totalorder %s135, %s138
      %p144 = scmp.eq.s32.totalorder %s16, 0
      %p145 = por %p143, %p144
      %p146 = scmp.ne.s32.totalorder %s135, %s138
      %p147 = scmp.eq.s32.totalorder %s21, 1
      %p148 = por %p146, %p147
      %p149 = scmp.ne.s32.totalorder %s138, %s139
      %p150 = scmp.eq.s32.totalorder %s21, 0
      %p151 = por %p149, %p150
      %p152 = scmp.ne.s32.totalorder %s138, %s139
      %p153 = scmp.eq.s32.totalorder %s22, 1
      %p154 = por %p152, %p153
      %p156 = scmp.ne.s32.totalorder %s139, %s155
      %p157 = scmp.eq.s32.totalorder %s22, 0
      %p158 = por %p156, %p157
      %p159 = scmp.le.s32.totalorder 1, %s16
      %p160 = scmp.lt.s32.totalorder %s16, 3
      %p161 = pnand %p159, %p160
      %p162 = pneg %p161
      // Predicated region
      $region9: #{_lambda_.1} parent=5 // pred_check
        _
      $region10: #{_lambda_.1} parent=5 // pred_check_branch
        %164 = sbr.rel (%p161) target = $region12
      $region11: #{_lambda_.1} parent=5 // pred_region
        %s165 = ssub.s32 %s16, 1
      $region12: #{_lambda_.1} parent=5 // pred_fallthru
        _
      %p166 = scmp.lt.s32.totalorder %s16, 2
      // Predicated region
      $region13: #{_lambda_.1} parent=5 // pred_check
        %p167 = pneg %p166
      $region14: #{_lambda_.1} parent=5 // pred_check_branch
        %169 = sbr.rel (%p167) target = $region16
      $region15: #{_lambda_.1} parent=5 // pred_region
        // Predicated region
        $region17: #{_lambda_.1} parent=15 // pred_check
          %p170 = pneg %p59
        $region18: #{_lambda_.1} parent=15 // pred_check_branch
          %172 = sbr.rel (%p170) target = $region20
        $region19: #{_lambda_.1} parent=15 // pred_region
          %s173 = sand.u32 %s49, 1
          %s174 = scalar_lea.sflag [#allocation5], %s173
          %s175 = sand.u32 %s49, 1
          %s176 = smul.addr %s175, 32
          %s177 = scalar_lea.vmem [#allocation4], %s176
          %s178 = sadd.s32 %s24, %s25
          %s179 = smul.u32 2, %s178
          %181 = vsyncadd %s174, 0
          %s182 = smul.addr %s23, 4
          %s183 = sadd.s32 %s179, %s182
          %s184 = smul.addr %s183, 8
          %s185 = scalar_lea.hbm %s0, %s184
          %s186 = sshll.u32 %s185, 4
          %s187 = int_to_ptr.hbm [resolvable:$true] %s186
          %s188 = sshll.u32 %s177, 4
          %s189 = int_to_ptr.vmem [resolvable:$true] %s188
          %194 = dma.hbm_to_vmem [thread:$0]  %s187, 512, %s189, %s174, 128, 128, 8
        $region20: #{_lambda_.1} parent=15 // pred_fallthru
          _
        // Predicated region
        $region21: #{_lambda_.1} parent=15 // pred_check
          %p195 = pneg %p89
        $region22: #{_lambda_.1} parent=15 // pred_check_branch
          %197 = sbr.rel (%p195) target = $region24
        $region23: #{_lambda_.1} parent=15 // pred_region
          %s198 = sand.u32 %s79, 1
          %s199 = scalar_lea.sflag [#allocation7], %s198
          %s200 = sand.u32 %s79, 1
          %s201 = smul.addr %s200, 48
          %s202 = scalar_lea.vmem [#allocation6], %s201
          %s203 = sadd.s32 %s24, %s25
          %s204 = smul.u32 2, %s203
          %206 = vsyncadd %s199, 0
          %s207 = smul.addr %s23, 6
          %s208 = sadd.s32 %s204, %s207
          %s209 = smul.addr %s208, 8
          %s210 = scalar_lea.hbm %s1, %s209
          %s211 = sshll.u32 %s210, 4
          %s212 = int_to_ptr.hbm [resolvable:$true] %s211
          %s213 = sshll.u32 %s202, 4
          %s214 = int_to_ptr.vmem [resolvable:$true] %s213
          %219 = dma.hbm_to_vmem [thread:$0]  %s212, 768, %s214, %s199, 128, 128, 8
        $region24: #{_lambda_.1} parent=15 // pred_fallthru
          _
      $region16: #{_lambda_.1} parent=5 // pred_fallthru
        _
      %p220 = scmp.le.s32.totalorder 1, %s16
      %p221 = scmp.lt.s32.totalorder %s16, 3
      %p222 = pnand %p220, %p221
      %p223 = pneg %p222
      // Predicated region
      $region25: #{_lambda_.1} parent=5 // pred_check
        _
      $region26: #{_lambda_.1} parent=5 // pred_check_branch
        %225 = sbr.rel (%p222) target = $region28
      $region27: #{_lambda_.1} parent=5 // pred_region
        %s226 = ssub.s32 %s16, 1
        %s227 = sand.u32 %s52, 1
        %s228 = scalar_lea.sflag [#allocation5], %s227
        %s229 = sand.u32 %s52, 1
        %s230 = smul.addr %s229, 32
        %s231 = scalar_lea.vmem [#allocation4], %s230
        // Predicated region
        $region29: #{_lambda_.1} parent=27 // pred_check
          %p232 = pneg %p65
        $region30: #{_lambda_.1} parent=27 // pred_check_branch
          %234 = sbr.rel (%p232) target = $region32
        $region31: #{_lambda_.1} parent=27 // pred_region
          %236 = dma.done %s228, 512
        $region32: #{_lambda_.1} parent=27 // pred_fallthru
          _
        %s237 = sand.u32 %s82, 1
        %s238 = scalar_lea.sflag [#allocation7], %s237
        %s239 = sand.u32 %s82, 1
        %s240 = smul.addr %s239, 48
        %s241 = scalar_lea.vmem [#allocation6], %s240
        // Predicated region
        $region33: #{_lambda_.1} parent=27 // pred_check
          %p242 = pneg %p95
        $region34: #{_lambda_.1} parent=27 // pred_check_branch
          %244 = sbr.rel (%p242) target = $region36
        $region35: #{_lambda_.1} parent=27 // pred_region
          %246 = dma.done %s238, 768
        $region36: #{_lambda_.1} parent=27 // pred_fallthru
          _
        %s247 = sand.u32 %s52, 1
        %s248 = scalar_lea.sflag [#allocation5], %s247
        %s249 = sand.u32 %s52, 1
        %s250 = smul.addr %s249, 32
        %s251 = scalar_lea.vmem [#allocation4], %s250
        %p252 = pneg %p65
        %p253 = pneg %p62
        %s254 = sand.u32 %s82, 1
        %s255 = scalar_lea.sflag [#allocation7], %s254
        %s256 = sand.u32 %s82, 1
        %s257 = smul.addr %s256, 48
        %s258 = scalar_lea.vmem [#allocation6], %s257
        %p259 = pneg %p95
        %p260 = pneg %p92
        %p261 = pneg %p123
        %p262 = pneg %p120
        %s263 = sadd.s32 %s26, %s27
        %p264 = scmp.lt.s32.totalorder %s263, 1
        %s265 = scalar_select %p264, %s263, 1
        %s266 = scalar_lea.vmem %s2, %s265
        %p267 = pneg %p151
        %p268 = pneg %p148
        %s269 = sadd.s32 %s26, %s27
        %p270 = scmp.lt.s32.totalorder %s269, 1
        %s271 = scalar_select %p270, %s269, 1
        %s272 = scalar_lea.vmem %s3, %s271
        %s273 = sadd.s32 %s27, %s28
        %s274 = smul.u32 2, %s273
        %s275 = sadd.s32 %s27, %s28
        %s276 = smul.u32 2, %s275
        %s277 = sadd.s32 %s26, %s27
        %p278 = scmp.lt.s32.totalorder %s277, 1
        %s279 = scalar_select %p278, %s277, 1
        %s280 = scalar_lea.vmem %s2, %s279
        %s281 = sadd.s32 %s26, %s27
        %s282 = sadd.s32 %s26, %s27
        %p283 = scmp.lt.s32.totalorder %s282, 1
        %s284 = scalar_select %p283, %s282, 1
        %s285 = scalar_lea.vmem %s3, %s284
        %s286 = sadd.s32 %s26, %s27
        %s287 = sadd.s32 %s27, %s28
        %p288 = scmp.eq.s32.totalorder %s28, 0
        // Predicated region
        $region37: #{_lambda_.1} parent=27 // pred_check
          %p289 = pneg %p288
        $region38: #{_lambda_.1} parent=27 // pred_check_branch
          %291 = sbr.rel (%p289) target = $region40
        $region39: #{_lambda_.1} parent=27 // pred_region
          %292 = vst [vmem:[#allocation2] sm:$0xff] 0.0
          %293 = vst [vmem:[#allocation3] sm:$0xff] 0.0
        $region40: #{_lambda_.1} parent=27 // pred_fallthru
          _
        %v294 = vlaneseq
        %v295 = vshrl.u32 %v294, 7
        %v296 = vadd.s32 %v295, 8
        %v297 = vlaneseq
        %v298 = vand.u32 %v297, 127
        %s299 = smul.u32 %s287, 16
        %v300 = vstv %s299
        %v301 = vadd.s32 %v295, %v300
        %v302 = vadd.s32 %v296, %v300
        %v303 = vadd.s32 %v301, 1
        %v304 = vadd.s32 %v302, 1
        %vm305 = vcmp.lt.s32.totalorder %v303, 16
        %vm306 = vcmp.lt.s32.totalorder %v304, 16
        %vm307 = vcmp.lt.s32.totalorder %v301, 16
        %vm308 = vcmp.lt.s32.totalorder %v302, 16
        %vm309 = vcmp.lt.s32.totalorder %v298, 127
        %vm310 = vmand %vm307, %vm309
        %vm311 = vmand %vm308, %vm309
        %v312 = vld [vmem:[%s231] sm:$0xff]
        %v313 = vld [vmem:[%s231 + $0x8] sm:$0xff]
        %v314 = vrot.slane %v312, 1
        %v315 = vrot.slane %v313, 1
        %vm316 = vcmp.lt.s32.totalorder %v295, 7
        %v317 = vsel %vm316, %v314, %v315
        %v318 = vsel %vm316, %v315, %v314
        %v319 = vsub.f32 %v317, %v312
        %v320 = vsub.f32 %v318, %v313
        %v321 = vand.u32 2147483647, %v319
        %v322 = vand.u32 2147483647, %v320
        %s323 = scalar_lea.vmem %s231, 16 [#allocation4]
        %v324 = vld [vmem:[%s323] sm:$0xff]
        %v325 = vld [vmem:[%s323 + $0x8] sm:$0xff]
        %v326 = vrot.slane %v324, 1
        %v327 = vrot.slane %v325, 1
        %v328 = vsel %vm316, %v326, %v327
        %v329 = vsel %vm316, %v327, %v326
        %v330 = vsub.f32 %v328, %v324
        %v331 = vsub.f32 %v329, %v325
        %v332 = vand.u32 2147483647, %v330
        %v333 = vand.u32 2147483647, %v331
        %v334 = vadd.f32 %v321, %v332
        %v335 = vadd.f32 %v322, %v333
        %v336 = vld [vmem:[%s241] sm:$0xff]
        %v337 = vld [vmem:[%s241 + $0x8] sm:$0xff]
        %v338 = vrot.slane %v336, 1
        %v339 = vrot.slane %v337, 1
        %v340 = vsel %vm316, %v338, %v339
        %v341 = vsel %vm316, %v339, %v338
        %v342 = vsub.f32 %v340, %v336
        %v343 = vsub.f32 %v341, %v337
        %v344 = vmul.f32 %v342, %v342
        %v345 = vmul.f32 %v343, %v343
        %s346 = scalar_lea.vmem %s241, 16 [#allocation6]
        %v347 = vld [vmem:[%s346] sm:$0xff]
        %v348 = vld [vmem:[%s346 + $0x8] sm:$0xff]
        %v349 = vrot.slane %v347, 1
        %v350 = vrot.slane %v348, 1
        %v351 = vsel %vm316, %v349, %v350
        %v352 = vsel %vm316, %v350, %v349
        %v353 = vsub.f32 %v351, %v347
        %v354 = vsub.f32 %v352, %v348
        %v355 = vmul.f32 %v353, %v353
        %v356 = vmul.f32 %v354, %v354
        %v357 = vadd.f32 %v344, %v355
        %v358 = vadd.f32 %v345, %v356
        %s359 = scalar_lea.vmem %s241, 32 [#allocation6]
        %v360 = vld [vmem:[%s359] sm:$0xff]
        %v361 = vld [vmem:[%s359 + $0x8] sm:$0xff]
        %v362 = vrot.slane %v360, 1
        %v363 = vrot.slane %v361, 1
        %v364 = vsel %vm316, %v362, %v363
        %v365 = vsel %vm316, %v363, %v362
        %v366 = vsub.f32 %v364, %v360
        %v367 = vsub.f32 %v365, %v361
        %v368 = vmul.f32 %v366, %v366
        %v369 = vmul.f32 %v367, %v367
        %v370 = vadd.f32 %v357, %v368
        %v371 = vadd.f32 %v358, %v369
        %v372 = vmul.f32 %v370, -7500.0
        %v373 = vmul.f32 %v371, -7500.0
        %v374 = vmul.f32 %v372, 1.442695
        %v375 = vpow.pop %v374
        %v376 = vmul.f32 %v373, 1.442695
        %v377 = vpow.pop %v376
        %v378 = vmul.f32 %v375, %v334
        %v379 = vmul.f32 %v377, %v335
        %v380 = vld [vmem:[#allocation2] sm:$0xff]
        %v381 = vsel %vm305, %v378, 0.0
        %v382 = vsel %vm306, %v379, 0.0
        %v383 = vadd.f32 %v381, %v382
        %v384 = vadd.f32 %v380, %v383
        %385 = vst [vmem:[#allocation2] sm:$0xff] %v384
        %v386 = vld [vmem:[%s231] sm:$0xff]
        %v387 = vld [vmem:[%s231 + $0x8] sm:$0xff]
        %388 = vrot.lane.b32.xlu0 %v386, 127
        %v389 = vpop.permute.xlu0 %388
        %390 = vrot.lane.b32.xlu0 %v387, 127
        %v391 = vpop.permute.xlu0 %390
        %v392 = vsub.f32 %v389, %v386
        %v393 = vsub.f32 %v391, %v387
        %v394 = vand.u32 2147483647, %v392
        %v395 = vand.u32 2147483647, %v393
        %v396 = vld [vmem:[%s323] sm:$0xff]
        %v397 = vld [vmem:[%s323 + $0x8] sm:$0xff]
        %398 = vrot.lane.b32.xlu0 %v396, 127
        %v399 = vpop.permute.xlu0 %398
        %400 = vrot.lane.b32.xlu0 %v397, 127
        %v401 = vpop.permute.xlu0 %400
        %v402 = vsub.f32 %v399, %v396
        %v403 = vsub.f32 %v401, %v397
        %v404 = vand.u32 2147483647, %v402
        %v405 = vand.u32 2147483647, %v403
        %v406 = vadd.f32 %v394, %v404
        %v407 = vadd.f32 %v395, %v405
        %v408 = vld [vmem:[%s241] sm:$0xff]
        %v409 = vld [vmem:[%s241 + $0x8] sm:$0xff]
        %410 = vrot.lane.b32.xlu0 %v408, 127
        %v411 = vpop.permute.xlu0 %410
        %412 = vrot.lane.b32.xlu0 %v409, 127
        %v413 = vpop.permute.xlu0 %412
        %v414 = vsub.f32 %v411, %v408
        %v415 = vsub.f32 %v413, %v409
        %v416 = vmul.f32 %v414, %v414
        %v417 = vmul.f32 %v415, %v415
        %v418 = vld [vmem:[%s346] sm:$0xff]
        %v419 = vld [vmem:[%s346 + $0x8] sm:$0xff]
        %420 = vrot.lane.b32.xlu0 %v418, 127
        %v421 = vpop.permute.xlu0 %420
        %422 = vrot.lane.b32.xlu0 %v419, 127
        %v423 = vpop.permute.xlu0 %422
        %v424 = vsub.f32 %v421, %v418
        %v425 = vsub.f32 %v423, %v419
        %v426 = vmul.f32 %v424, %v424
        %v427 = vmul.f32 %v425, %v425
        %v428 = vadd.f32 %v416, %v426
        %v429 = vadd.f32 %v417, %v427
        %v430 = vld [vmem:[%s359] sm:$0xff]
        %v431 = vld [vmem:[%s359 + $0x8] sm:$0xff]
        %432 = vrot.lane.b32.xlu0 %v430, 127
        %v433 = vpop.permute.xlu0 %432
        %434 = vrot.lane.b32.xlu0 %v431, 127
        %v435 = vpop.permute.xlu0 %434
        %v436 = vsub.f32 %v433, %v430
        %v437 = vsub.f32 %v435, %v431
        %v438 = vmul.f32 %v436, %v436
        %v439 = vmul.f32 %v437, %v437
        %v440 = vadd.f32 %v428, %v438
        %v441 = vadd.f32 %v429, %v439
        %v442 = vmul.f32 %v440, -7500.0
        %v443 = vmul.f32 %v441, -7500.0
        %v444 = vmul.f32 %v442, 1.442695
        %v445 = vpow.pop %v444
        %v446 = vmul.f32 %v443, 1.442695
        %v447 = vpow.pop %v446
        %v448 = vmul.f32 %v445, %v406
        %v449 = vmul.f32 %v447, %v407
        %v450 = vld [vmem:[#allocation3] sm:$0xff]
        %v451 = vsel %vm310, %v448, 0.0
        %v452 = vsel %vm311, %v449, 0.0
        %v453 = vadd.f32 %v451, %v452
        %v454 = vadd.f32 %v450, %v453
        %455 = vst [vmem:[#allocation3] sm:$0xff] %v454
        // Predicated region
        $region41: #{_lambda_.1} parent=27 // pred_check
          %p456 = pneg %p288
        $region42: #{_lambda_.1} parent=27 // pred_check_branch
          %458 = sbr.rel (%p456) target = $region44
        $region43: #{_lambda_.1} parent=27 // pred_region
          %v459 = vld [vmem:[#allocation2] sm:$0xff]
          %460 = vadd.xlane.f32.xlu0 %v459
          %v461 = vpop.xlane.xlu0 %460
          %v462 = vrot.slane %v461, 4
          %v463 = vadd.f32 %v461, %v462
          %v464 = vrot.slane %v463, 2
          %v465 = vadd.f32 %v463, %v464
          %v466 = vrot.slane %v465, 1
          %v467 = vadd.f32 %v465, %v466
          %s468 = vtos %v467
          %v469 = vstv %s468
          %vm470 = vcmask 0
          %471 = vst.msk [vmem:[%s280] sm:$0x1] %vm470, %v469
          %v472 = vld [vmem:[#allocation3] sm:$0xff]
          %473 = vadd.xlane.f32.xlu0 %v472
          %v474 = vpop.xlane.xlu0 %473
          %v475 = vrot.slane %v474, 4
          %v476 = vadd.f32 %v474, %v475
          %v477 = vrot.slane %v476, 2
          %v478 = vadd.f32 %v476, %v477
          %v479 = vrot.slane %v478, 1
          %v480 = vadd.f32 %v478, %v479
          %s481 = vtos %v480
          %v482 = vstv %s481
          %483 = vst.msk [vmem:[%s285] sm:$0x1] %vm470, %v482
        $region44: #{_lambda_.1} parent=27 // pred_fallthru
          _
        %s484 = sadd.s32 %s26, %s27
        %p485 = scmp.lt.s32.totalorder %s484, 1
        %s486 = scalar_select %p485, %s484, 1
        %s487 = scalar_lea.vmem %s2, %s486
        %s488 = sadd.s32 %s26, %s27
        %p489 = scmp.lt.s32.totalorder %s488, 1
        %s490 = scalar_select %p489, %s488, 1
        %s491 = scalar_lea.vmem %s3, %s490
        // Predicated region
        $region45: #{_lambda_.1} parent=27 // pred_check
          %p492 = pneg %p120
        $region46: #{_lambda_.1} parent=27 // pred_check_branch
          %494 = sbr.rel (%p492) target = $region48
        $region47: #{_lambda_.1} parent=27 // pred_region
          %s495 = sadd.s32 %s26, %s27
        $region48: #{_lambda_.1} parent=27 // pred_fallthru
          _
        // Predicated region
        $region49: #{_lambda_.1} parent=27 // pred_check
          %p496 = pneg %p148
        $region50: #{_lambda_.1} parent=27 // pred_check_branch
          %498 = sbr.rel (%p496) target = $region52
        $region51: #{_lambda_.1} parent=27 // pred_region
          %s499 = sadd.s32 %s26, %s27
        $region52: #{_lambda_.1} parent=27 // pred_fallthru
          _
      $region28: #{_lambda_.1} parent=5 // pred_fallthru
        _
      %p500 = scmp.le.s32.totalorder 2, %s16
      // Predicated region
      $region53: #{_lambda_.1} parent=5 // pred_check
        %p501 = pneg %p500
      $region54: #{_lambda_.1} parent=5 // pred_check_branch
        %503 = sbr.rel (%p501) target = $region56
      $region55: #{_lambda_.1} parent=5 // pred_region
        %s504 = ssub.s32 %s16, 2
        // Predicated region
        $region57: #{_lambda_.1} parent=55 // pred_check
          %p505 = pneg %p126
        $region58: #{_lambda_.1} parent=55 // pred_check_branch
          %507 = sbr.rel (%p505) target = $region60
        $region59: #{_lambda_.1} parent=55 // pred_region
          %s508 = sadd.s32 %s29, %s30
          %p509 = scmp.lt.s32.totalorder %s508, 1
          %s510 = scalar_select %p509, %s508, 1
          %s511 = scalar_lea.vmem %s2, %s510
        $region60: #{_lambda_.1} parent=55 // pred_fallthru
          _
        // Predicated region
        $region61: #{_lambda_.1} parent=55 // pred_check
          %p512 = pneg %p154
        $region62: #{_lambda_.1} parent=55 // pred_check_branch
          %514 = sbr.rel (%p512) target = $region64
        $region63: #{_lambda_.1} parent=55 // pred_region
          %s515 = sadd.s32 %s29, %s30
          %p516 = scmp.lt.s32.totalorder %s515, 1
          %s517 = scalar_select %p516, %s515, 1
          %s518 = scalar_lea.vmem %s3, %s517
        $region64: #{_lambda_.1} parent=55 // pred_fallthru
          _
      $region56: #{_lambda_.1} parent=5 // pred_fallthru
        _
    $region6: #{_lambda_.1} parent=1 // loop_footer
      %s20 = sadd.s32 1, %s16
    $region7: #{_lambda_.1} parent=1 // loop_footer_branch
      %15 = sbr.rel target = $region3
    $region8: #{_lambda_.1} parent=1 // loop_exit
      _
    %519 = vsyncpa [#allocation5], 1
    %s520 = scalar_lea.sflag [#allocation5], 1
    %521 = vsyncpa %s520, 1
    %522 = vsyncpa [#allocation7], 1
    %s523 = scalar_lea.sflag [#allocation7], 1
    %524 = vsyncpa %s523, 1

</llo_original>
